<compile_context>
chip_gen: v7x
topology: tpu7x:2x2x1
jax: 0.10.0
libtpu: 0.0.40
codegen_flags: <defaults>
</compile_context>

<pallas_src>
import functools

import jax
import jax.numpy as jnp
from jax import lax
from jax.experimental import pallas as pl
from jax.experimental.pallas import tpu as pltpu

LANES = 128
SUBLANES = 8
ROW_BLOCK_MAX = 8192  # (8192, 128) f32 block = 4 MiB per input per pipeline buffer


def _dice_partial_kernel(total_rows, row_block, need_mask,
                         o_ref, t_ref, out_ref):
    """Per-block partial sums.

    out_ref block shape: (1, 2, 1, LANES)
      out[0, 0] = per-lane partial of sum(o * t)   (intersection)
      out[0, 1] = per-lane partial of sum(o + t)   (union)
    """
    o = o_ref[...].astype(jnp.float32)
    t = t_ref[...].astype(jnp.float32)

    if need_mask:
        # Last grid block may extend past the array; zero the invalid rows.
        i = pl.program_id(0)
        row_ids = lax.broadcasted_iota(jnp.int32, (row_block, LANES), 0)
        valid = row_ids < (total_rows - i * row_block)
        zero = jnp.zeros_like(o)
        o = jnp.where(valid, o, zero)
        t = jnp.where(valid, t, zero)

    prod = o * t   # intersection contribution
    ssum = o + t   # union contribution (sum(o) + sum(t) == sum(o + t))

    out_ref[0, 0] = jnp.sum(prod, axis=0, keepdims=True)
    out_ref[0, 1] = jnp.sum(ssum, axis=0, keepdims=True)


def get_dice_score(outputs, target, smooth=1.0):
    """Scalar dice loss, computed by a Pallas TPU streaming-reduction kernel."""
    assert outputs.shape == target.shape
    o_flat = jnp.reshape(outputs, (-1,))
    t_flat = jnp.reshape(target, (-1,))
    n = o_flat.shape[0]

    if n == 0:
        # intersection = union = 0 -> dice = smooth/smooth = 1 -> loss = 0
        return jnp.float32(0.0)

    # Pad (only if necessary) to a multiple of one (8, 128) vreg so the flat
    # vector can be viewed as a lane-dense (rows, 128) slab with rows % 8 == 0.
    # Zero padding does not change any of the sums.
    chunk = SUBLANES * LANES
    n_pad = ((n + chunk - 1) // chunk) * chunk
    if n_pad != n:
        o_flat = jnp.pad(o_flat, (0, n_pad - n))
        t_flat = jnp.pad(t_flat, (0, n_pad - n))

    rows = n_pad // LANES
    o2d = o_flat.reshape(rows, LANES)
    t2d = t_flat.reshape(rows, LANES)

    # Block size: as large as possible up to ROW_BLOCK_MAX (rows is always a
    # multiple of 8, so the BlockSpec tiling constraint is satisfied either
    # way: divisible by 8 or equal to the full dim).
    row_block = min(ROW_BLOCK_MAX, rows)
    num_blocks = -(-rows // row_block)
    need_mask = (rows % row_block) != 0

    kernel = functools.partial(_dice_partial_kernel, rows, row_block, need_mask)

    partials = pl.pallas_call(
        kernel,
        out_shape=jax.ShapeDtypeStruct((num_blocks, 2, 1, LANES), jnp.float32),
        grid_spec=pltpu.PrefetchScalarGridSpec(
            num_scalar_prefetch=0,
            grid=(num_blocks,),
            in_specs=[
                pl.BlockSpec((row_block, LANES), lambda i: (i, 0)),
                pl.BlockSpec((row_block, LANES), lambda i: (i, 0)),
            ],
            out_specs=pl.BlockSpec((1, 2, 1, LANES), lambda i: (i, 0, 0, 0)),
        ),
        compiler_params=pltpu.CompilerParams(
            dimension_semantics=("parallel",),     # megacore-shardable (v7x)
            vmem_limit_bytes=32 * 1024 * 1024,
        ),
    )(o2d, t2d)

    # Tiny final reduction + dice formula in plain JAX (smooth not compiled in).
    intersection = jnp.sum(partials[:, 0])
    union = jnp.sum(partials[:, 1])
    smooth = jnp.float32(smooth)
    dice = (2.0 * intersection + smooth) / (union + smooth)
    return 1.0 - dice


def _reference(outputs, target, smooth=1.0):
    o = jnp.reshape(outputs, (-1,)).astype(jnp.float32)
    t = jnp.reshape(target, (-1,)).astype(jnp.float32)
    inter = jnp.sum(o * t)
    union = jnp.sum(o) + jnp.sum(t)
    dice = (2.0 * inter + smooth) / (union + smooth)
    return 1.0 - dice


if __name__ == "__main__":
    key = jax.random.PRNGKey(0)
    k1, k2, k3, k4 = jax.random.split(key, 4)

    # Small NCHW input, as the PyTorch module would receive
    # (predicted mask probabilities + binary target).
    outputs = jax.random.uniform(k1, (2, 4, 16, 16), dtype=jnp.float32)
    target = (jax.random.uniform(k2, (2, 4, 16, 16)) > 0.5).astype(jnp.float32)

    loss = get_dice_score(outputs, target, smooth=1.0)
    jax.block_until_ready(loss)
    ref = _reference(outputs, target, smooth=1.0)
    assert jnp.allclose(loss, ref, rtol=1e-5, atol=1e-6), (loss, ref)

    # Second check: larger input with a tail that needs the (8,128) pad and,
    # when rows > ROW_BLOCK_MAX is exceeded, a masked partial last block.
    outputs2 = jax.random.uniform(k3, (8, 3, 128, 120), dtype=jnp.float32)
    target2 = (jax.random.uniform(k4, (8, 3, 128, 120)) > 0.5).astype(jnp.float32)

    loss2 = get_dice_score(outputs2, target2, smooth=1.0)
    jax.block_until_ready(loss2)
    ref2 = _reference(outputs2, target2, smooth=1.0)
    assert jnp.allclose(loss2, ref2, rtol=1e-5, atol=1e-6), (loss2, ref2)

    # Third check: bf16 inputs stream at half the HBM traffic (cast in-kernel).
    outputs3 = outputs2.astype(jnp.bfloat16)
    target3 = target2.astype(jnp.bfloat16)
    loss3 = get_dice_score(outputs3, target3, smooth=1.0)
    jax.block_until_ready(loss3)
    ref3 = _reference(outputs3, target3, smooth=1.0)
    assert jnp.allclose(loss3, ref3, rtol=2e-2, atol=1e-3), (loss3, ref3)

    print("KERNEL_OK")
</pallas_src>

<mosaic_0001>
module attributes {stable_mosaic.version = 11 : i64} {
  func.func @_dice_partial_kernel(%arg0: i32, %arg1: memref<16x128xf32, #tpu.memory_space<vmem>>, %arg2: memref<16x128xf32, #tpu.memory_space<vmem>>, %arg3: memref<1x2x1x128xf32, #tpu.memory_space<vmem>>) attributes {dimension_semantics = [#tpu.dimension_semantics<parallel>], iteration_bounds = array<i64: 1>, scalar_prefetch = 0 : i64, scratch_operands = 0 : i64, tpu.core_type = #tpu.core_type<tc>, window_params = [{transform_indices = @transform_0, window_bounds = array<i64: 16, 128>}, {transform_indices = @transform_1, window_bounds = array<i64: 16, 128>}, {transform_indices = @transform_2, window_bounds = array<i64: 1, 2, 1, 128>}]} {
    %c0 = arith.constant 0 : index
    %c0_0 = arith.constant 0 : index
    %0 = vector.load %arg1[%c0, %c0_0] : memref<16x128xf32, #tpu.memory_space<vmem>>, vector<16x128xf32>
    %c0_1 = arith.constant 0 : index
    %c0_2 = arith.constant 0 : index
    %1 = vector.load %arg2[%c0_1, %c0_2] : memref<16x128xf32, #tpu.memory_space<vmem>>, vector<16x128xf32>
    %2 = arith.mulf %0, %1 : vector<16x128xf32>
    %3 = arith.addf %0, %1 : vector<16x128xf32>
    %cst = arith.constant dense<0.000000e+00> : vector<128xf32>
    %4 = vector.multi_reduction <add>, %2, %cst [0] : vector<16x128xf32> to vector<128xf32>
    %5 = vector.shape_cast %4 : vector<128xf32> to vector<1x128xf32>
    %c0_3 = arith.constant 0 : index
    %c0_4 = arith.constant 0 : index
    %c0_5 = arith.constant 0 : index
    %c0_6 = arith.constant 0 : index
    %6 = vector.load %arg3[%c0_3, %c0_4, %c0_5, %c0_6] : memref<1x2x1x128xf32, #tpu.memory_space<vmem>>, vector<1x1x1x128xf32>
    %7 = vector.shape_cast %6 : vector<1x1x1x128xf32> to vector<1x128xf32>
    %8 = vector.shape_cast %5 : vector<1x128xf32> to vector<1x1x1x128xf32>
    tpu.vector_store %arg3[%c0_3, %c0_4, %c0_5, %c0_6], %8 {strides = array<i32>} : memref<1x2x1x128xf32, #tpu.memory_space<vmem>>, vector<1x1x1x128xf32>,
    %cst_7 = arith.constant dense<0.000000e+00> : vector<128xf32>
    %9 = vector.multi_reduction <add>, %3, %cst_7 [0] : vector<16x128xf32> to vector<128xf32>
    %10 = vector.shape_cast %9 : vector<128xf32> to vector<1x128xf32>
    %c0_8 = arith.constant 0 : index
    %c1 = arith.constant 1 : index
    %c0_9 = arith.constant 0 : index
    %c0_10 = arith.constant 0 : index
    %11 = vector.load %arg3[%c0_8, %c1, %c0_9, %c0_10] : memref<1x2x1x128xf32, #tpu.memory_space<vmem>>, vector<1x1x1x128xf32>
    %12 = vector.shape_cast %11 : vector<1x1x1x128xf32> to vector<1x128xf32>
    %13 = vector.shape_cast %10 : vector<1x128xf32> to vector<1x1x1x128xf32>
    tpu.vector_store %arg3[%c0_8, %c1, %c0_9, %c0_10], %13 {strides = array<i32>} : memref<1x2x1x128xf32, #tpu.memory_space<vmem>>, vector<1x1x1x128xf32>,
    return
  }
  func.func @transform_0(%arg0: i32) -> (i32, i32) {
    %c0_i32 = arith.constant 0 : i32
    %c0_i32_0 = arith.constant 0 : i32
    return %arg0, %c0_i32 : i32, i32
  }
  func.func @transform_1(%arg0: i32) -> (i32, i32) {
    %c0_i32 = arith.constant 0 : i32
    %c0_i32_0 = arith.constant 0 : i32
    return %arg0, %c0_i32 : i32, i32
  }
  func.func @transform_2(%arg0: i32) -> (i32, i32, i32, i32) {
    %c0_i32 = arith.constant 0 : i32
    %c0_i32_0 = arith.constant 0 : i32
    %c0_i32_1 = arith.constant 0 : i32
    %c0_i32_2 = arith.constant 0 : i32
    return %arg0, %c0_i32, %c0_i32_0, %c0_i32_1 : i32, i32, i32, i32
  }
}

</mosaic_0001>

<llo_original>
// kernel: tpu_custom_call.1
$region0: #{tpu_custom_call.1}
  #allocation0 [shape = 'u32[]', space=smem, size = 0x4, offset = 0x4, fixed_abs, tag = 'smem constant byte address 0x4 - core index']
  #allocation1 [shape = 'u32[144,128]{1,0:T(1,128)}', space=vmem, size = 0x12000, scoped, tag = 'internal scratch']
  %s0 = inlined_call_operand.hbm [shape: f32[16,128], index: 0, kind: input, shape index: {}]
  %s1 = inlined_call_operand.hbm [shape: f32[16,128], index: 1, kind: input, shape index: {}]
  %s2 = inlined_call_operand.hbm [shape: f32[1,2,1,128], index: 2, kind: output, shape index: {}]
  %s3 = sld [smem:[#allocation0]]
  $region26: #{tpu_custom_call.1} parent=0
    _
  %s5 = ssub.s32 1, %s3
  %s6 = scalar_select 0, %s5, %s3
  $region1: #{tpu_custom_call.1} parent=0
    #allocation2 [shape = 'u8[8192]{0}', space=vmem, size = 0x2000, scoped, tag = 'input window, operand 0, single buffered']
    #allocation3 [shape = 's32[1]{0}', space=sflag, size = 0x4, scoped, tag = 'scoped memory for tpu_custom_call.1']
    #allocation4 [shape = 's32[1]{0}', space=sflag, size = 0x4, scoped, tag = 'scoped memory for tpu_custom_call.1']
    #allocation5 [shape = 'u8[8192]{0}', space=vmem, size = 0x2000, scoped, tag = 'input window, operand 1, single buffered']
    #allocation6 [shape = 's32[1]{0}', space=sflag, size = 0x4, scoped, tag = 'scoped memory for tpu_custom_call.1']
    #allocation7 [shape = 'u8[1024]{0}', space=vmem, size = 0x400, scoped, tag = 'output window, operand 0, single buffered']
    %7 = vsyncpa [#allocation3], 0
    %8 = vsyncpa [#allocation6], 0
    %9 = vsyncpa [#allocation4], 0
    // Predicated region
    $region2: #{tpu_custom_call.1} parent=1 // pred_check
      _
    $region3: #{tpu_custom_call.1} parent=1 // pred_check_branch
      %11 = sbr.rel (0) target = $region5
    $region4: #{tpu_custom_call.1} parent=1 // pred_region
      %s13 = ssub.s32 256, 256
      %14 = vsyncadd [#allocation3], %s13
      %s15 = sshll.u32 [#allocation2], 4
      %s16 = int_to_ptr.vmem [resolvable:$true] %s15
      %21 = dma.hbm_to_vmem [thread:$0]  %s0, 256, %s16, [#allocation3], 128, 128, 8
    $region5: #{tpu_custom_call.1} parent=1 // pred_fallthru
      _
    // Predicated region
    $region6: #{tpu_custom_call.1} parent=1 // pred_check
      _
    $region7: #{tpu_custom_call.1} parent=1 // pred_check_branch
      %23 = sbr.rel (0) target = $region9
    $region8: #{tpu_custom_call.1} parent=1 // pred_region
      %s25 = ssub.s32 256, 256
      %26 = vsyncadd [#allocation6], %s25
      %s27 = sshll.u32 [#allocation5], 4
      %s28 = int_to_ptr.vmem [resolvable:$true] %s27
      %33 = dma.hbm_to_vmem [thread:$0]  %s1, 256, %s28, [#allocation6], 128, 128, 8
    $region9: #{tpu_custom_call.1} parent=1 // pred_fallthru
      _
    // Predicated region
    $region10: #{tpu_custom_call.1} parent=1 // pred_check
      _
    $region11: #{tpu_custom_call.1} parent=1 // pred_check_branch
      %35 = sbr.rel (0) target = $region13
    $region12: #{tpu_custom_call.1} parent=1 // pred_region
      %36 = dma.done [#allocation3], 256
    $region13: #{tpu_custom_call.1} parent=1 // pred_fallthru
      _
    // Predicated region
    $region14: #{tpu_custom_call.1} parent=1 // pred_check
      _
    $region15: #{tpu_custom_call.1} parent=1 // pred_check_branch
      %38 = sbr.rel (0) target = $region17
    $region16: #{tpu_custom_call.1} parent=1 // pred_region
      %39 = dma.done [#allocation6], 256
    $region17: #{tpu_custom_call.1} parent=1 // pred_fallthru
      _
    %v40 = vld [vmem:[#allocation2] sm:$0xff]
    %v41 = vld [vmem:[#allocation2 + $0x8] sm:$0xff]
    %v42 = vld [vmem:[#allocation5] sm:$0xff]
    %v43 = vld [vmem:[#allocation5 + $0x8] sm:$0xff]
    %v44 = vmul.f32 %v40, %v42
    %v45 = vmul.f32 %v41, %v43
    %v46 = vadd.f32 %v40, %v42
    %v47 = vadd.f32 %v41, %v43
    %v48 = vadd.f32 %v44, %v45
    %v49 = vrot.slane %v48, 4
    %v50 = vadd.f32 %v48, %v49
    %v51 = vrot.slane %v50, 2
    %v52 = vadd.f32 %v50, %v51
    %v53 = vrot.slane %v52, 1
    %v54 = vadd.f32 %v52, %v53
    %55 = vst [vmem:[#allocation7] sm:$0x1] %v54
    %v56 = vadd.f32 %v46, %v47
    %v57 = vrot.slane %v56, 4
    %v58 = vadd.f32 %v56, %v57
    %v59 = vrot.slane %v58, 2
    %v60 = vadd.f32 %v58, %v59
    %v61 = vrot.slane %v60, 1
    %v62 = vadd.f32 %v60, %v61
    %s63 = scalar_lea.vmem [#allocation7], 1
    %64 = vst [vmem:[%s63] sm:$0x1] %v62
    // Predicated region
    $region18: #{tpu_custom_call.1} parent=1 // pred_check
      _
    $region19: #{tpu_custom_call.1} parent=1 // pred_check_branch
      %66 = sbr.rel (0) target = $region21
    $region20: #{tpu_custom_call.1} parent=1 // pred_region
      %s68 = ssub.s32 32, 32
      %69 = vsyncadd [#allocation4], %s68
      %s70 = sshll.u32 [#allocation7], 4
      %s71 = int_to_ptr.vmem [resolvable:$true] %s70
      %76 = dma.vmem_to_hbm [thread:$0]  %s71, 32, %s2, [#allocation4], 16, 16, 1
    $region21: #{tpu_custom_call.1} parent=1 // pred_fallthru
      _
    // Predicated region
    $region22: #{tpu_custom_call.1} parent=1 // pred_check
      _
    $region23: #{tpu_custom_call.1} parent=1 // pred_check_branch
      %78 = sbr.rel (0) target = $region25
    $region24: #{tpu_custom_call.1} parent=1 // pred_region
      %79 = dma.done [#allocation4], 32
    $region25: #{tpu_custom_call.1} parent=1 // pred_fallthru
      _
    %80 = vsyncpa [#allocation3], 1
    %81 = vsyncpa [#allocation6], 1
    %82 = vsyncpa [#allocation4], 1

</llo_original>
